<compile_context>
chip_gen: v5e
topology: v5e:2x2
jax: 0.10.0
libtpu: 0.0.40
codegen_flags: <defaults>
</compile_context>

<pallas_src>
import functools
import math

import jax
import jax.numpy as jnp
from jax.experimental import pallas as pl
from jax.experimental.pallas import tpu as pltpu


def _vmem_limit_bytes() -> int:
    """Generation-specific scoped-VMEM cap: ~3/4 of physical, <= 100 MiB."""
    try:
        info = pltpu.get_tpu_info()
        cap = int(getattr(info, "vmem_capacity_bytes", 0))
    except Exception:
        cap = 0
    if cap <= 0:
        # Safe everywhere: above v5e's 16 MiB / v6e-v7x's 32 MiB defaults and
        # below v7x's 64 MiB physical VMEM.
        return 48 * 1024 * 1024
    return min(100 * 1024 * 1024, (cap * 3) // 4)


# ---------------------------------------------------------------------------
# Kernel 1: Linear projection  (B, L, D) -> bf16 head-major (B, H, L, dt)
# ---------------------------------------------------------------------------
def _proj_kernel(x_ref, w_ref, b_ref, o_ref, *, n_head: int, d_tensor: int,
                 scale: float):
    """o[h] = ((x @ W + b) * scale)[:, h*dt:(h+1)*dt], written head-major.

    x_ref: (1, block_l, D)      w_ref: (D, D) bf16, [in, out]
    b_ref: (1, D) f32           o_ref: (1, H, block_l, dt) bf16
    """
    x = x_ref[0].astype(jnp.bfloat16)                       # (block_l, D)
    xp = jnp.dot(x, w_ref[...], preferred_element_type=jnp.float32)
    xp = xp + b_ref[...]
    if scale != 1.0:   # fold 1/sqrt(dt) into q once (trace-time branch)
        xp = xp * scale
    # Head-major write: gives the attention kernel a ready head batch dim.
    for h in range(n_head):
        lo = h * d_tensor
        o_ref[0, h, :, :] = xp[:, lo:lo + d_tensor].astype(o_ref.dtype)


def _project(x, w_t, b, *, n_head, d_tensor, scale, block_l, vmem_limit):
    B, L, D = x.shape
    block_l = min(block_l, L)
    assert L % block_l == 0, "length must be a multiple of the row block"
    kernel = functools.partial(_proj_kernel, n_head=n_head,
                               d_tensor=d_tensor, scale=scale)
    return pl.pallas_call(
        kernel,
        out_shape=jax.ShapeDtypeStruct((B, n_head, L, d_tensor), jnp.bfloat16),
        grid_spec=pltpu.PrefetchScalarGridSpec(
            num_scalar_prefetch=0,
            grid=(B, L // block_l),
            in_specs=[
                pl.BlockSpec((1, block_l, D), lambda bi, li: (bi, li, 0)),
                # Constant block index -> fetched once, no re-DMA per step.
                pl.BlockSpec((D, D), lambda bi, li: (0, 0)),
                pl.BlockSpec((1, D), lambda bi, li: (0, 0)),
            ],
            out_specs=pl.BlockSpec((1, n_head, block_l, d_tensor),
                                   lambda bi, li: (bi, 0, li, 0)),
        ),
        compiler_params=pltpu.CompilerParams(
            dimension_semantics=("parallel", "parallel"),
            vmem_limit_bytes=vmem_limit,
        ),
    )(x, w_t, b)


# ---------------------------------------------------------------------------
# Kernel 2: flash-style attention + per-head output projection
# ---------------------------------------------------------------------------
def _attention_kernel(q_ref, k_ref, v_ref, wc_ref, bc_ref, o_ref,
                      m_ref, l_ref, acc_ref, *, n_head: int):
    """One grid step = (batch, q-block, kv-block); kv is the reduction axis.

    q_ref:  (1, H, block_q, dt) bf16 (pre-scaled by 1/sqrt(dt))
    k_ref:  (1, H, block_kv, dt) bf16
    v_ref:  (1, H, block_kv, dt) bf16
    wc_ref: (H, dt, D) bf16 output-projection weight, split per head
    bc_ref: (1, D) f32
    o_ref:  (1, block_q, D)
    m/l/acc: f32 VMEM scratch (online-softmax state, persists over kv axis)
    """
    f32 = jnp.float32
    kv_i = pl.program_id(2)

    @pl.when(kv_i == 0)
    def _init():
        m_ref[...] = jnp.full(m_ref.shape, -jnp.inf, f32)
        l_ref[...] = jnp.zeros(l_ref.shape, f32)
        acc_ref[...] = jnp.zeros(acc_ref.shape, f32)

    q = q_ref[0]                                   # (H, bq, dt)  bf16
    k = k_ref[0]                                   # (H, bkv, dt) bf16
    v = v_ref[0]                                   # (H, bkv, dt) bf16

    # Scores batched over heads; contracting the last dims feeds q @ k^T to
    # the MXU with no materialized transpose.  f32 accumulation.
    s = jnp.einsum("hqd,hkd->hqk", q, k, preferred_element_type=f32)
    # TODO(synk): the module's optional attention `mask` (masked_fill -10000)
    # is not plumbed through; this implements the mask=None path only.

    m_prev = m_ref[...]
    m_new = jnp.maximum(m_prev, jnp.max(s, axis=-1, keepdims=True))
    alpha = jnp.exp(m_prev - m_new)                         # (H, bq, 1)
    p = jnp.exp(s - m_new)                                  # (H, bq, bkv) f32
    l_ref[...] = alpha * l_ref[...] + jnp.sum(p, axis=-1, keepdims=True)
    pv = jnp.einsum("hqk,hkd->hqd", p.astype(v.dtype), v,
                    preferred_element_type=f32)
    acc_ref[...] = alpha * acc_ref[...] + pv
    m_ref[...] = m_new

    @pl.when(kv_i == pl.num_programs(2) - 1)
    def _finalize():
        inv_l = pl.reciprocal(l_ref[...], approx=True)      # EUP slot, ~free
        ctx = (acc_ref[...] * inv_l).astype(jnp.bfloat16)   # (H, bq, dt)
        # Output projection accumulated per head (no head concat): every
        # matmul has full lane width N = D.
        out = jnp.dot(ctx[0], wc_ref[0], preferred_element_type=f32)
        for h in range(1, n_head):
            out = out + jnp.dot(ctx[h], wc_ref[h], preferred_element_type=f32)
        o_ref[0] = (out + bc_ref[...]).astype(o_ref.dtype)


def _attention(qp, kp, vp, wc, bc, *, out_dtype, block_q, block_kv, vmem_limit):
    B, H, Lq, dt = qp.shape
    Lk = kp.shape[2]
    D = H * dt
    block_q = min(block_q, Lq)
    block_kv = min(block_kv, Lk)
    assert Lq % block_q == 0 and Lk % block_kv == 0, (
        "sequence lengths must be multiples of the attention blocks")
    # TODO(synk): non-multiple / ragged sequence lengths need a padded tail path.
    kernel = functools.partial(_attention_kernel, n_head=H)
    return pl.pallas_call(
        kernel,
        out_shape=jax.ShapeDtypeStruct((B, Lq, D), out_dtype),
        grid_spec=pltpu.PrefetchScalarGridSpec(
            num_scalar_prefetch=0,
            grid=(B, Lq // block_q, Lk // block_kv),
            in_specs=[
                pl.BlockSpec((1, H, block_q, dt), lambda b, i, j: (b, 0, i, 0)),
                pl.BlockSpec((1, H, block_kv, dt), lambda b, i, j: (b, 0, j, 0)),
                pl.BlockSpec((1, H, block_kv, dt), lambda b, i, j: (b, 0, j, 0)),
                pl.BlockSpec((H, dt, D), lambda b, i, j: (0, 0, 0)),
                pl.BlockSpec((1, D), lambda b, i, j: (0, 0)),
            ],
            out_specs=pl.BlockSpec((1, block_q, D), lambda b, i, j: (b, i, 0)),
            scratch_shapes=[
                pltpu.VMEM((H, block_q, 1), jnp.float32),   # running max m
                pltpu.VMEM((H, block_q, 1), jnp.float32),   # running sum l
                pltpu.VMEM((H, block_q, dt), jnp.float32),  # context accum
            ],
        ),
        compiler_params=pltpu.CompilerParams(
            # Batch & query-block axes stay parallel (megacore / v7x 2 TCs);
            # only the KV reduction axis is sequential.
            dimension_semantics=("parallel", "parallel", "arbitrary"),
            vmem_limit_bytes=vmem_limit,
        ),
    )(qp, kp, vp, wc, bc)


# ---------------------------------------------------------------------------
# Public wrapper (matches MultiHeadAttention.forward with mask=None)
# ---------------------------------------------------------------------------
def multi_head_attention(q, k, v, params, n_head: int, *,
                         block_l: int = 256, block_q: int = 256,
                         block_kv: int = 512):
    """q: (B, Lq, D); k, v: (B, Lk, D) f32.  params: torch-layout Linear params."""
    B, Lq, D = q.shape
    assert k.shape == v.shape and k.shape[0] == B and k.shape[2] == D
    assert D % n_head == 0
    dt = D // n_head
    bf16, f32 = jnp.bfloat16, jnp.float32
    vmem_limit = _vmem_limit_bytes()

    # torch Linear weight is (out, in); transpose to (in, out) -> kernel does x @ W.
    wq = params["w_q"]["weight"].T.astype(bf16)
    wk = params["w_k"]["weight"].T.astype(bf16)
    wv = params["w_v"]["weight"].T.astype(bf16)
    # Output projection pre-split per head: (D, D) -> (H, dt, D).
    wc = params["w_concat"]["weight"].T.reshape(n_head, dt, D).astype(bf16)

    bq = params["w_q"]["bias"].reshape(1, D).astype(f32)
    bk = params["w_k"]["bias"].reshape(1, D).astype(f32)
    bv = params["w_v"]["bias"].reshape(1, D).astype(f32)
    bc = params["w_concat"]["bias"].reshape(1, D).astype(f32)

    scale = 1.0 / math.sqrt(dt)
    common = dict(n_head=n_head, d_tensor=dt, block_l=block_l,
                  vmem_limit=vmem_limit)

    # Input projections computed exactly once (not per query block).
    qp = _project(q, wq, bq, scale=scale, **common)  # (B, H, Lq, dt) bf16, scaled
    kp = _project(k, wk, bk, scale=1.0, **common)    # (B, H, Lk, dt) bf16
    vp = _project(v, wv, bv, scale=1.0, **common)

    return _attention(qp, kp, vp, wc, bc, out_dtype=q.dtype,
                      block_q=block_q, block_kv=block_kv,
                      vmem_limit=vmem_limit)


# ---------------------------------------------------------------------------
# Reference + test
# ---------------------------------------------------------------------------
def _init_linear(key, d_in, d_out):
    """Mimics torch.nn.Linear's uniform(-1/sqrt(in), 1/sqrt(in)) init."""
    kw, kb = jax.random.split(key)
    bound = 1.0 / math.sqrt(d_in)
    weight = jax.random.uniform(kw, (d_out, d_in), jnp.float32, -bound, bound)
    bias = jax.random.uniform(kb, (d_out,), jnp.float32, -bound, bound)
    return {"weight": weight, "bias": bias}


def _reference(q, k, v, params, n_head):
    """Pure-JAX f32 reference of the PyTorch forward (mask=None)."""
    def linear(x, p):
        return x @ p["weight"].T + p["bias"]

    B, L, D = q.shape
    dt = D // n_head

    def split(t):  # (B, L, D) -> (B, H, L, dt)
        return t.reshape(B, -1, n_head, dt).transpose(0, 2, 1, 3)

    qp = split(linear(q, params["w_q"]))
    kp = split(linear(k, params["w_k"]))
    vp = split(linear(v, params["w_v"]))
    score = jnp.einsum("bhld,bhmd->bhlm", qp, kp) / math.sqrt(dt)
    score = jax.nn.softmax(score, axis=-1)
    out = jnp.einsum("bhlm,bhmd->bhld", score, vp)
    out = out.transpose(0, 2, 1, 3).reshape(B, L, D)
    return linear(out, params["w_concat"])


if __name__ == "__main__":
    def run_case(B, L, D, H, **blocks):
        key = jax.random.PRNGKey(0)
        k_q, k_k, k_v, kp1, kp2, kp3, kp4 = jax.random.split(key, 7)
        q = jax.random.normal(k_q, (B, L, D), jnp.float32)
        k = jax.random.normal(k_k, (B, L, D), jnp.float32)
        v = jax.random.normal(k_v, (B, L, D), jnp.float32)
        params = {
            "w_q": _init_linear(kp1, D, D),
            "w_k": _init_linear(kp2, D, D),
            "w_v": _init_linear(kp3, D, D),
            "w_concat": _init_linear(kp4, D, D),
        }
        out = jax.block_until_ready(
            multi_head_attention(q, k, v, params, n_head=H, **blocks))
        ref = _reference(q, k, v, params, H)
        assert out.shape == (B, L, D)
        # bf16 MXU operands (f32 accumulation) + approx reciprocal -> loosened
        # tolerance vs the f32 reference (documented trade-off).
        assert jnp.allclose(out, ref, atol=5e-2, rtol=5e-2), (
            f"mismatch vs reference at shape {(B, L, D, H)}")

    # Small shape implied by the module (single q/kv block).
    run_case(B=2, L=8, D=32, H=4)
    # Moderate shape exercising multiple query and KV blocks (online-softmax
    # accumulation across the kv grid axis).
    run_case(B=1, L=512, D=128, H=2, block_l=128, block_q=128, block_kv=128)

    print("KERNEL_OK")
</pallas_src>

<mosaic_0001>
module attributes {stable_mosaic.version = 11 : i64} {
  func.func @_proj_kernel(%arg0: i32, %arg1: i32, %arg2: memref<1x8x32xf32, #tpu.memory_space<vmem>>, %arg3: memref<32x32xbf16, #tpu.memory_space<vmem>>, %arg4: memref<1x32xf32, #tpu.memory_space<vmem>>, %arg5: memref<1x4x8x8xbf16, #tpu.memory_space<vmem>>) attributes {dimension_semantics = [#tpu.dimension_semantics<parallel>, #tpu.dimension_semantics<parallel>], iteration_bounds = array<i64: 2, 1>, scalar_prefetch = 0 : i64, scratch_operands = 0 : i64, tpu.core_type = #tpu.core_type<tc>, window_params = [{transform_indices = @transform_0, window_bounds = array<i64: 1, 8, 32>}, {pipeline_mode = #tpu.pipeline_mode<synchronous>, transform_indices = @transform_1, window_bounds = array<i64: 32, 32>}, {pipeline_mode = #tpu.pipeline_mode<synchronous>, transform_indices = @transform_2, window_bounds = array<i64: 1, 32>}, {transform_indices = @transform_3, window_bounds = array<i64: 1, 4, 8, 8>}]} {
    %c0 = arith.constant 0 : index
    %c0_0 = arith.constant 0 : index
    %c0_1 = arith.constant 0 : index
    %0 = vector.load %arg2[%c0, %c0_0, %c0_1] : memref<1x8x32xf32, #tpu.memory_space<vmem>>, vector<1x8x32xf32>
    %1 = vector.shape_cast %0 : vector<1x8x32xf32> to vector<8x32xf32>
    %2 = arith.truncf %1 : vector<8x32xf32> to vector<8x32xbf16>
    %c0_2 = arith.constant 0 : index
    %c0_3 = arith.constant 0 : index
    %3 = vector.load %arg3[%c0_2, %c0_3] : memref<32x32xbf16, #tpu.memory_space<vmem>>, vector<32x32xbf16>
    %cst = arith.constant dense<0.000000e+00> : vector<8x32xf32>
    %4 = tpu.matmul %2, %3, %cst {dimension_numbers = #tpu.dot_dimension_numbers<[1], [0], [0], [1], [0, 0, 1, 1], [], []>} : vector<8x32xbf16>, vector<32x32xbf16>, vector<8x32xf32> -> vector<8x32xf32>
    %c0_4 = arith.constant 0 : index
    %c0_5 = arith.constant 0 : index
    %5 = vector.load %arg4[%c0_4, %c0_5] : memref<1x32xf32, #tpu.memory_space<vmem>>, vector<1x32xf32>
    %6 = vector.broadcast %5 : vector<1x32xf32> to vector<8x32xf32>
    %7 = arith.addf %4, %6 : vector<8x32xf32>
    %cst_6 = arith.constant 0.353553385 : f32
    %8 = vector.broadcast %cst_6 : f32 to vector<8x32xf32>
    %9 = arith.mulf %7, %8 : vector<8x32xf32>
    %10 = vector.extract_strided_slice %9 {offsets = [0, 0], sizes = [8, 8], strides = [1, 1]} : vector<8x32xf32> to vector<8x8xf32>
    %11 = arith.truncf %10 : vector<8x8xf32> to vector<8x8xbf16>
    %c0_7 = arith.constant 0 : index
    %c0_8 = arith.constant 0 : index
    %c0_9 = arith.constant 0 : index
    %c0_10 = arith.constant 0 : index
    %12 = vector.load %arg5[%c0_7, %c0_8, %c0_9, %c0_10] : memref<1x4x8x8xbf16, #tpu.memory_space<vmem>>, vector<1x1x8x8xbf16>
    %13 = vector.shape_cast %12 : vector<1x1x8x8xbf16> to vector<8x8xbf16>
    %14 = vector.shape_cast %11 : vector<8x8xbf16> to vector<1x1x8x8xbf16>
    tpu.vector_store %arg5[%c0_7, %c0_8, %c0_9, %c0_10], %14 {strides = array<i32>} : memref<1x4x8x8xbf16, #tpu.memory_space<vmem>>, vector<1x1x8x8xbf16>,
    %15 = vector.extract_strided_slice %9 {offsets = [0, 8], sizes = [8, 8], strides = [1, 1]} : vector<8x32xf32> to vector<8x8xf32>
    %16 = arith.truncf %15 : vector<8x8xf32> to vector<8x8xbf16>
    %c0_11 = arith.constant 0 : index
    %c1 = arith.constant 1 : index
    %c0_12 = arith.constant 0 : index
    %c0_13 = arith.constant 0 : index
    %17 = vector.load %arg5[%c0_11, %c1, %c0_12, %c0_13] : memref<1x4x8x8xbf16, #tpu.memory_space<vmem>>, vector<1x1x8x8xbf16>
    %18 = vector.shape_cast %17 : vector<1x1x8x8xbf16> to vector<8x8xbf16>
    %19 = vector.shape_cast %16 : vector<8x8xbf16> to vector<1x1x8x8xbf16>
    tpu.vector_store %arg5[%c0_11, %c1, %c0_12, %c0_13], %19 {strides = array<i32>} : memref<1x4x8x8xbf16, #tpu.memory_space<vmem>>, vector<1x1x8x8xbf16>,
    %20 = vector.extract_strided_slice %9 {offsets = [0, 16], sizes = [8, 8], strides = [1, 1]} : vector<8x32xf32> to vector<8x8xf32>
    %21 = arith.truncf %20 : vector<8x8xf32> to vector<8x8xbf16>
    %c0_14 = arith.constant 0 : index
    %c2 = arith.constant 2 : index
    %c0_15 = arith.constant 0 : index
    %c0_16 = arith.constant 0 : index
    %22 = vector.load %arg5[%c0_14, %c2, %c0_15, %c0_16] : memref<1x4x8x8xbf16, #tpu.memory_space<vmem>>, vector<1x1x8x8xbf16>
    %23 = vector.shape_cast %22 : vector<1x1x8x8xbf16> to vector<8x8xbf16>
    %24 = vector.shape_cast %21 : vector<8x8xbf16> to vector<1x1x8x8xbf16>
    tpu.vector_store %arg5[%c0_14, %c2, %c0_15, %c0_16], %24 {strides = array<i32>} : memref<1x4x8x8xbf16, #tpu.memory_space<vmem>>, vector<1x1x8x8xbf16>,
    %25 = vector.extract_strided_slice %9 {offsets = [0, 24], sizes = [8, 8], strides = [1, 1]} : vector<8x32xf32> to vector<8x8xf32>
    %26 = arith.truncf %25 : vector<8x8xf32> to vector<8x8xbf16>
    %c0_17 = arith.constant 0 : index
    %c3 = arith.constant 3 : index
    %c0_18 = arith.constant 0 : index
    %c0_19 = arith.constant 0 : index
    %27 = vector.load %arg5[%c0_17, %c3, %c0_18, %c0_19] : memref<1x4x8x8xbf16, #tpu.memory_space<vmem>>, vector<1x1x8x8xbf16>
    %28 = vector.shape_cast %27 : vector<1x1x8x8xbf16> to vector<8x8xbf16>
    %29 = vector.shape_cast %26 : vector<8x8xbf16> to vector<1x1x8x8xbf16>
    tpu.vector_store %arg5[%c0_17, %c3, %c0_18, %c0_19], %29 {strides = array<i32>} : memref<1x4x8x8xbf16, #tpu.memory_space<vmem>>, vector<1x1x8x8xbf16>,
    return
  }
  func.func @transform_0(%arg0: i32, %arg1: i32) -> (i32, i32, i32) {
    %c0_i32 = arith.constant 0 : i32
    %c0_i32_0 = arith.constant 0 : i32
    return %arg0, %arg1, %c0_i32 : i32, i32, i32
  }
  func.func @transform_1(%arg0: i32, %arg1: i32) -> (i32, i32) {
    %c0_i32 = arith.constant 0 : i32
    %c0_i32_0 = arith.constant 0 : i32
    %c0_i32_1 = arith.constant 0 : i32
    return %c0_i32, %c0_i32_0 : i32, i32
  }
  func.func @transform_2(%arg0: i32, %arg1: i32) -> (i32, i32) {
    %c0_i32 = arith.constant 0 : i32
    %c0_i32_0 = arith.constant 0 : i32
    %c0_i32_1 = arith.constant 0 : i32
    return %c0_i32, %c0_i32_0 : i32, i32
  }
  func.func @transform_3(%arg0: i32, %arg1: i32) -> (i32, i32, i32, i32) {
    %c0_i32 = arith.constant 0 : i32
    %c0_i32_0 = arith.constant 0 : i32
    %c0_i32_1 = arith.constant 0 : i32
    return %arg0, %c0_i32, %arg1, %c0_i32_0 : i32, i32, i32, i32
  }
}

</mosaic_0001>

<llo_original>
// kernel: tpu_custom_call.1
$region0: #{tpu_custom_call.1}
  #allocation0 [shape = 'u32[]', space=smem, size = 0x4, offset = 0x4, fixed_abs, tag = 'smem constant byte address 0x4 - core index']
  #allocation1 [shape = 'u32[72,128]{1,0:T(1,128)}', space=vmem, size = 0x9000, scoped, tag = 'internal scratch']
  %s0 = inlined_call_operand.hbm [shape: f32[2,8,32], index: 0, kind: input, shape index: {}]
  %s1 = inlined_call_operand.hbm [shape: bf16[32,32], index: 1, kind: input, shape index: {}]
  %s2 = inlined_call_operand.vmem [shape: f32[1,32], index: 2, kind: input, shape index: {}]
  %s3 = inlined_call_operand.hbm [shape: bf16[2,4,8,8], index: 3, kind: output, shape index: {}]
  %s4 = sld [smem:[#allocation0]]
  $region53: #{tpu_custom_call.1} parent=0
    _
  %s6 = ssub.s32 1, %s4
  %s7 = scalar_select 0, %s6, %s4
  $region1: #{tpu_custom_call.1} parent=0
    #allocation2 [shape = 'u8[8192]{0}', space=vmem, size = 0x2000, scoped, tag = 'input window, operand 0']
    #allocation3 [shape = 's32[2]{0}', space=sflag, size = 0x8, scoped, tag = 'scoped memory for tpu_custom_call.1']
    #allocation4 [shape = 's32[2]{0}', space=sflag, size = 0x8, scoped, tag = 'scoped memory for tpu_custom_call.1']
    #allocation5 [shape = 'u8[8192]{0}', space=vmem, size = 0x2000, scoped, tag = 'input window, operand 1, single buffered']
    #allocation6 [shape = 's32[1]{0}', space=sflag, size = 0x4, scoped, tag = 'scoped memory for tpu_custom_call.1']
    #allocation7 [shape = 'u8[16384]{0}', space=vmem, size = 0x4000, scoped, tag = 'output window, operand 0']
    %8 = vsyncpa [#allocation3], 0
    %s9 = scalar_lea.sflag [#allocation3], 1
    %10 = vsyncpa %s9, 0
    %11 = vsyncpa [#allocation6], 0
    %12 = vsyncpa [#allocation4], 0
    %s13 = scalar_lea.sflag [#allocation4], 1
    %14 = vsyncpa %s13, 0
    loop: start=0, step=1, limit=4
    $region2: #{tpu_custom_call.1} parent=1 // loop_pre_header
      _
    $region3: #{tpu_custom_call.1} parent=1 // loop_header
      %s16 = sphi 0, %s20
      %p17 = scmp.ge.s32.totalorder %s16, 4
      %s23 = sphi 0, %s35
      %s24 = sphi 0, %s31
      %s25 = sphi 0, %s23
      %s26 = sphi 0, %s24
      %s27 = sphi 0, %s25
      %s28 = sphi 0, %s26
      %s40 = sphi 0, %s42
      %s43 = sphi 0, %s40
      %s44 = sphi 0, %s43
      %s60 = sphi 0, %s44
      %s64 = sphi 0, %s64
      %s66 = sphi 0, %s64
      %s67 = sphi 0, %s66
      %s81 = sphi 0, %s67
      %s85 = sphi 0, %s85
      %s87 = sphi 0, %s85
      %s88 = sphi 0, %s87
      %s102 = sphi 0, %s88
      %s110 = sphi 0, %s112
      %s113 = sphi 0, %s110
      %s114 = sphi 0, %s113
      %s130 = sphi 0, %s114
    $region4: #{tpu_custom_call.1} parent=1 // loop_header_branch
      %19 = sbr.rel (%p17) target = $region8
    $region5: #{tpu_custom_call.1} parent=1 // loop_body
      %s21 = ssub.s32 %s16, 1
      %s22 = ssub.s32 %s16, 2
      %s29 = sadd.s32 1, %s24
      %p30 = scmp.ge.s32.totalorder %s29, 1
      %s31 = scalar_select %p30, 0, %s29
      %s32 = sadd.s32 1, %s23
      %s33 = scalar_select %p30, %s32, %s23
      %p34 = scmp.ge.s32.totalorder %s33, 2
      %s35 = scalar_select %p34, 0, %s33
      %s36 = ssub.s32 %s23, %s35
      %s37 = ssub.s32 %s24, %s31
      %s38 = sor.u32 %s36, %s37
      %p39 = scmp.eq.s32.totalorder %s38, 0
      %s41 = sadd.s32 %s40, 1
      %s42 = scalar_select %p39, %s40, %s41
      %p45 = pneg %p39
      %p46 = scmp.eq.s32.totalorder %s16, 1
      %p47 = por %p45, %p46
      %p48 = scmp.ne.s32.totalorder %s40, %s43
      %p49 = scmp.eq.s32.totalorder %s16, 0
      %p50 = por %p48, %p49
      %p51 = scmp.ne.s32.totalorder %s40, %s43
      %p52 = scmp.eq.s32.totalorder %s21, 1
      %p53 = por %p51, %p52
      %p54 = scmp.ne.s32.totalorder %s43, %s44
      %p55 = scmp.eq.s32.totalorder %s21, 0
      %p56 = por %p54, %p55
      %p57 = scmp.ne.s32.totalorder %s43, %s44
      %p58 = scmp.eq.s32.totalorder %s22, 1
      %p59 = por %p57, %p58
      %p61 = scmp.ne.s32.totalorder %s44, %s60
      %p62 = scmp.eq.s32.totalorder %s22, 0
      %p63 = por %p61, %p62
      %s65 = sadd.s32 %s64, 1
      %p68 = scmp.eq.s32.totalorder %s16, 1
      %p69 = scmp.ne.s32.totalorder %s64, %s66
      %p70 = scmp.eq.s32.totalorder %s16, 0
      %p71 = por %p69, %p70
      %p72 = scmp.ne.s32.totalorder %s64, %s66
      %p73 = scmp.eq.s32.totalorder %s21, 1
      %p74 = por %p72, %p73
      %p75 = scmp.ne.s32.totalorder %s66, %s67
      %p76 = scmp.eq.s32.totalorder %s21, 0
      %p77 = por %p75, %p76
      %p78 = scmp.ne.s32.totalorder %s66, %s67
      %p79 = scmp.eq.s32.totalorder %s22, 1
      %p80 = por %p78, %p79
      %p82 = scmp.ne.s32.totalorder %s67, %s81
      %p83 = scmp.eq.s32.totalorder %s22, 0
      %p84 = por %p82, %p83
      %s86 = sadd.s32 %s85, 1
      %p89 = scmp.eq.s32.totalorder %s16, 1
      %p90 = scmp.ne.s32.totalorder %s85, %s87
      %p91 = scmp.eq.s32.totalorder %s16, 0
      %p92 = por %p90, %p91
      %p93 = scmp.ne.s32.totalorder %s85, %s87
      %p94 = scmp.eq.s32.totalorder %s21, 1
      %p95 = por %p93, %p94
      %p96 = scmp.ne.s32.totalorder %s87, %s88
      %p97 = scmp.eq.s32.totalorder %s21, 0
      %p98 = por %p96, %p97
      %p99 = scmp.ne.s32.totalorder %s87, %s88
      %p100 = scmp.eq.s32.totalorder %s22, 1
      %p101 = por %p99, %p100
      %p103 = scmp.ne.s32.totalorder %s88, %s102
      %p104 = scmp.eq.s32.totalorder %s22, 0
      %p105 = por %p103, %p104
      %s106 = ssub.s32 %s23, %s35
      %s107 = ssub.s32 %s24, %s31
      %s108 = sor.u32 %s106, %s107
      %p109 = scmp.eq.s32.totalorder %s108, 0
      %s111 = sadd.s32 %s110, 1
      %s112 = scalar_select %p109, %s110, %s111
      %p115 = pneg %p109
      %p116 = scmp.eq.s32.totalorder %s16, 1
      %p117 = por %p115, %p116
      %p118 = scmp.ne.s32.totalorder %s110, %s113
      %p119 = scmp.eq.s32.totalorder %s16, 0
      %p120 = por %p118, %p119
      %p121 = scmp.ne.s32.totalorder %s110, %s113
      %p122 = scmp.eq.s32.totalorder %s21, 1
      %p123 = por %p121, %p122
      %p124 = scmp.ne.s32.totalorder %s113, %s114
      %p125 = scmp.eq.s32.totalorder %s21, 0
      %p126 = por %p124, %p125
      %p127 = scmp.ne.s32.totalorder %s113, %s114
      %p128 = scmp.eq.s32.totalorder %s22, 1
      %p129 = por %p127, %p128
      %p131 = scmp.ne.s32.totalorder %s114, %s130
      %p132 = scmp.eq.s32.totalorder %s22, 0
      %p133 = por %p131, %p132
      %p134 = scmp.le.s32.totalorder 1, %s16
      %p135 = scmp.lt.s32.totalorder %s16, 3
      %p136 = pnand %p134, %p135
      %p137 = pneg %p136
      // Predicated region
      $region9: #{tpu_custom_call.1} parent=5 // pred_check
        _
      $region10: #{tpu_custom_call.1} parent=5 // pred_check_branch
        %139 = sbr.rel (%p136) target = $region12
      $region11: #{tpu_custom_call.1} parent=5 // pred_region
        %s140 = ssub.s32 %s16, 1
        // Predicated region
        $region13: #{tpu_custom_call.1} parent=11 // pred_check
          %p141 = pneg %p77
        $region14: #{tpu_custom_call.1} parent=11 // pred_check_branch
          %143 = sbr.rel (%p141) target = $region16
        $region15: #{tpu_custom_call.1} parent=11 // pred_region
          %145 = vsyncadd [#allocation6], 0
          %s146 = sshll.u32 %s1, 4
          %s147 = int_to_ptr.hbm [resolvable:$true] %s146
          %s148 = sshll.u32 [#allocation5], 4
          %s149 = int_to_ptr.vmem [resolvable:$true] %s148
          %154 = dma.hbm_to_vmem [thread:$0]  %s147, 256, %s149, [#allocation6], 64, 64, 4
        $region16: #{tpu_custom_call.1} parent=11 // pred_fallthru
          _
        // Predicated region
        $region17: #{tpu_custom_call.1} parent=11 // pred_check
          %p155 = pneg %p98
        $region18: #{tpu_custom_call.1} parent=11 // pred_check_branch
          %157 = sbr.rel (%p155) target = $region20
        $region19: #{tpu_custom_call.1} parent=11 // pred_region
          _
        $region20: #{tpu_custom_call.1} parent=11 // pred_fallthru
          _
      $region12: #{tpu_custom_call.1} parent=5 // pred_fallthru
        _
      %p158 = scmp.lt.s32.totalorder %s16, 2
      // Predicated region
      $region21: #{tpu_custom_call.1} parent=5 // pred_check
        %p159 = pneg %p158
      $region22: #{tpu_custom_call.1} parent=5 // pred_check_branch
        %161 = sbr.rel (%p159) target = $region24
      $region23: #{tpu_custom_call.1} parent=5 // pred_region
        // Predicated region
        $region25: #{tpu_custom_call.1} parent=23 // pred_check
          %p162 = pneg %p50
        $region26: #{tpu_custom_call.1} parent=23 // pred_check_branch
          %164 = sbr.rel (%p162) target = $region28
        $region27: #{tpu_custom_call.1} parent=23 // pred_region
          %s165 = sand.u32 %s40, 1
          %s166 = scalar_lea.sflag [#allocation3], %s165
          %s167 = sand.u32 %s40, 1
          %s168 = smul.addr %s167, 8
          %s169 = scalar_lea.vmem [#allocation2], %s168
          %171 = vsyncadd %s166, 0
          %s172 = sadd.s32 %s24, %s23
          %s173 = smul.addr %s172, 8
          %s174 = scalar_lea.hbm %s0, %s173
          %s176 = sshll.u32 %s174, 4
          %s177 = int_to_ptr.hbm [resolvable:$true] %s176
          %s178 = sshll.u32 %s169, 4
          %s179 = int_to_ptr.vmem [resolvable:$true] %s178
          %181 = dma.hbm_to_vmem [thread:$0]  %s177, 128, %s179, %s166
        $region28: #{tpu_custom_call.1} parent=23 // pred_fallthru
          _
      $region24: #{tpu_custom_call.1} parent=5 // pred_fallthru
        _
      %p182 = scmp.le.s32.totalorder 1, %s16
      %p183 = scmp.lt.s32.totalorder %s16, 3
      %p184 = pnand %p182, %p183
      %p185 = pneg %p184
      // Predicated region
      $region29: #{tpu_custom_call.1} parent=5 // pred_check
        _
      $region30: #{tpu_custom_call.1} parent=5 // pred_check_branch
        %187 = sbr.rel (%p184) target = $region32
      $region31: #{tpu_custom_call.1} parent=5 // pred_region
        %s188 = ssub.s32 %s16, 1
        %s189 = sand.u32 %s43, 1
        %s190 = scalar_lea.sflag [#allocation3], %s189
        %s191 = sand.u32 %s43, 1
        %s192 = smul.addr %s191, 8
        %s193 = scalar_lea.vmem [#allocation2], %s192
        // Predicated region
        $region33: #{tpu_custom_call.1} parent=31 // pred_check
          %p194 = pneg %p56
        $region34: #{tpu_custom_call.1} parent=31 // pred_check_branch
          %196 = sbr.rel (%p194) target = $region36
        $region35: #{tpu_custom_call.1} parent=31 // pred_region
          %198 = dma.done %s190, 128
        $region36: #{tpu_custom_call.1} parent=31 // pred_fallthru
          _
        // Predicated region
        $region37: #{tpu_custom_call.1} parent=31 // pred_check
          %p199 = pneg %p77
        $region38: #{tpu_custom_call.1} parent=31 // pred_check_branch
          %201 = sbr.rel (%p199) target = $region40
        $region39: #{tpu_custom_call.1} parent=31 // pred_region
          %203 = dma.done [#allocation6], 256
        $region40: #{tpu_custom_call.1} parent=31 // pred_fallthru
          _
        %s204 = sand.u32 %s43, 1
        %s205 = scalar_lea.sflag [#allocation3], %s204
        %s206 = sand.u32 %s43, 1
        %s207 = smul.addr %s206, 8
        %s208 = scalar_lea.vmem [#allocation2], %s207
        %p209 = pneg %p56
        %p210 = pneg %p53
        %p211 = pneg %p77
        %p212 = pneg %p74
        %p213 = pneg %p98
        %p214 = pneg %p95
        %p215 = pneg %p126
        %p216 = pneg %p123
        %s217 = sand.u32 %s113, 1
        %s218 = scalar_lea.sflag [#allocation4], %s217
        %s219 = sand.u32 %s113, 1
        %s220 = smul.addr %s219, 16
        %s221 = scalar_lea.vmem [#allocation7], %s220
        %v223 = vld [vmem:[%s193] sm:$0xff]
        %v224 = vpack.c.bf16 %v223, %v223
        %v225 = vld [vmem:[#allocation5] sm:$0xf]
        %v226 = vld [vmem:[#allocation5 + $0x4] sm:$0xf]
        %v227 = vld [vmem:[#allocation5 + $0x8] sm:$0xf]
        %v228 = vld [vmem:[#allocation5 + $0xc] sm:$0xf]
        %v229 = vld [vmem:[%s2] sm:$0x1]
        %v231 = vperm.slane %v229, 0
        %v237 = vunpack.c.l.b16 %v225
        %v238 = vunpack.c.l.b16 %v226
        %v239 = vunpack.c.l.b16 %v227
        %v240 = vunpack.c.l.b16 %v228
        %v241 = vpack.c.b16 %v238, %v237
        %v242 = vpack.c.b16 %v240, %v239
        %vm245 = vcmask 261120
        %v247 = vsel %vm245, %v224, 0
        %249 = vmatpush.bf16.msra.mxu0 0
        %250 = vmatpush.bf16.msra.mxu0 0
        %251 = vmatpush.bf16.msra.mxu0 0
        %252 = vmatpush.bf16.msra.mxu0 0
        %253 = vmatpush.bf16.msra.mxu0 0
        %254 = vmatpush.bf16.msra.mxu0 0
        %255 = vmatpush.bf16.msra.mxu0 %v242
        %256 = vmatpush.bf16.msra.mxu0 %v241
        %257 = vmatmul.bf16.gmra.mxu0 %v247
        %v258 = vpop.f32.mrf.mxu0
        %v259 = vadd.f32 %v231, %v258
        %v260 = vpop.f32.mrf.mxu0
        %261 = vdwg.mxu0
        %v262 = vmul.f32 %v259, 0.35355338
        %v263 = vpack.c.bf16 %v262, %v262
        %vm264 = vcmask 60416
        %265 = vst.msk [vmem:[%s221] sm:$0xf] %vm264, %v263
        %267 = vrot.lane.b32.xlu0 %v263, 120
        %v268 = vpop.permute.xlu0 %267
        %s270 = scalar_lea.vmem %s221, 4 [#allocation7]
        %271 = vst.msk [vmem:[%s270] sm:$0xf] %vm264, %v268
        %272 = vrot.lane.b32.xlu0 %v263, 112
        %v273 = vpop.permute.xlu0 %272
        %s275 = scalar_lea.vmem %s221, 8 [#allocation7]
        %276 = vst.msk [vmem:[%s275] sm:$0xf] %vm264, %v273
        %277 = vrot.lane.b32.xlu0 %v263, 104
        %v278 = vpop.permute.xlu0 %277
        %s280 = scalar_lea.vmem %s221, 12 [#allocation7]
        %281 = vst.msk [vmem:[%s280] sm:$0xf] %vm264, %v278
        %s282 = sand.u32 %s113, 1
        %s283 = scalar_lea.sflag [#allocation4], %s282
        %s284 = sand.u32 %s113, 1
        %s285 = smul.addr %s284, 16
        %s286 = scalar_lea.vmem [#allocation7], %s285
        // Predicated region
        $region41: #{tpu_custom_call.1} parent=31 // pred_check
          %p287 = pneg %p123
        $region42: #{tpu_custom_call.1} parent=31 // pred_check_branch
          %289 = sbr.rel (%p287) target = $region44
        $region43: #{tpu_custom_call.1} parent=31 // pred_region
          %291 = vsyncadd %s283, 0
          %s292 = smul.addr %s25, 4
          %s293 = sadd.s32 %s26, %s292
          %s294 = smul.addr %s293, 4
          %s295 = scalar_lea.hbm %s3, %s294
          %s296 = sshll.u32 %s286, 4
          %s297 = int_to_ptr.vmem [resolvable:$true] %s296
          %s298 = sshll.u32 %s295, 4
          %s299 = int_to_ptr.hbm [resolvable:$true] %s298
          %304 = dma.vmem_to_hbm [thread:$0]  %s297, 256, %s299, %s283, 64, 64, 4
        $region44: #{tpu_custom_call.1} parent=31 // pred_fallthru
          _
      $region32: #{tpu_custom_call.1} parent=5 // pred_fallthru
        _
      %p305 = scmp.le.s32.totalorder 2, %s16
      // Predicated region
      $region45: #{tpu_custom_call.1} parent=5 // pred_check
        %p306 = pneg %p305
      $region46: #{tpu_custom_call.1} parent=5 // pred_check_branch
        %308 = sbr.rel (%p306) target = $region48
      $region47: #{tpu_custom_call.1} parent=5 // pred_region
        %s309 = ssub.s32 %s16, 2
        // Predicated region
        $region49: #{tpu_custom_call.1} parent=47 // pred_check
          %p310 = pneg %p129
        $region50: #{tpu_custom_call.1} parent=47 // pred_check_branch
          %312 = sbr.rel (%p310) target = $region52
        $region51: #{tpu_custom_call.1} parent=47 // pred_region
          %s313 = sand.u32 %s114, 1
          %s314 = scalar_lea.sflag [#allocation4], %s313
          %s315 = sand.u32 %s114, 1
          %s316 = smul.addr %s315, 16
          %s317 = scalar_lea.vmem [#allocation7], %s316
          %319 = dma.done %s314, 256
        $region52: #{tpu_custom_call.1} parent=47 // pred_fallthru
          _
      $region48: #{tpu_custom_call.1} parent=5 // pred_fallthru
        _
    $region6: #{tpu_custom_call.1} parent=1 // loop_footer
      %s20 = sadd.s32 1, %s16
    $region7: #{tpu_custom_call.1} parent=1 // loop_footer_branch
      %15 = sbr.rel target = $region3
    $region8: #{tpu_custom_call.1} parent=1 // loop_exit
      _
    %320 = vsyncpa [#allocation3], 1
    %s321 = scalar_lea.sflag [#allocation3], 1
    %322 = vsyncpa %s321, 1
    %323 = vsyncpa [#allocation6], 1
    %324 = vsyncpa [#allocation4], 1
    %s325 = scalar_lea.sflag [#allocation4], 1
    %326 = vsyncpa %s325, 1

</llo_original>
